<compile_context>
chip_gen: v7x
topology: tpu7x:2x2x1
jax: 0.10.0
libtpu: 0.0.40
codegen_flags: <defaults>
</compile_context>

<pallas_src>
import jax
import jax.numpy as jnp
from jax.experimental import pallas as pl
from jax.experimental.pallas import tpu as pltpu

LANES = 128          # lane width of a vreg (feature dims padded to this)
TM = 256             # row tile of A_hat / output (v6e/v7x-friendly; works on v5e)
TK_MAX = 1024        # K (= node) tile of the A_hat contraction
VMEM_LIMIT = 48 * 1024 * 1024   # explicit scoped-VMEM budget (< 64 MiB v7x physical)


def _round_up(n, m):
    return ((n + m - 1) // m) * m


def _pad2d(x, rows=None, cols=None, value=0.0):
    r, c = x.shape
    rows = r if rows is None else rows
    cols = c if cols is None else cols
    return jnp.pad(x, ((0, rows - r), (0, cols - c)), constant_values=value)


# ---------------------------------------------------------------------------
# Kernel 1: per-layer projection, hoisted out of the aggregation
#   xw = h @ W_eff,  xl = h @ W_lin_eff      (bf16 outputs, f32 accumulate)
# ---------------------------------------------------------------------------
def gcn_project(h, w_eff, wl_eff, *, tm=TM):
    Np, Finp = h.shape
    Foutp = w_eff.shape[1]

    def kernel(h_ref, w_ref, wl_ref, xw_ref, xl_ref):
        hv = h_ref[...]
        xw_ref[...] = jnp.dot(hv, w_ref[...],
                              preferred_element_type=jnp.float32).astype(xw_ref.dtype)
        xl_ref[...] = jnp.dot(hv, wl_ref[...],
                              preferred_element_type=jnp.float32).astype(xl_ref.dtype)

    return pl.pallas_call(
        kernel,
        out_shape=(jax.ShapeDtypeStruct((Np, Foutp), jnp.bfloat16),
                   jax.ShapeDtypeStruct((Np, Foutp), jnp.bfloat16)),
        grid=(Np // tm,),
        in_specs=[
            pl.BlockSpec((tm, Finp), lambda i: (i, 0)),
            pl.BlockSpec((Finp, Foutp), lambda i: (0, 0)),
            pl.BlockSpec((Finp, Foutp), lambda i: (0, 0)),
        ],
        out_specs=(pl.BlockSpec((tm, Foutp), lambda i: (i, 0)),
                   pl.BlockSpec((tm, Foutp), lambda i: (i, 0))),
        compiler_params=pltpu.CompilerParams(
            dimension_semantics=("parallel",),
            vmem_limit_bytes=VMEM_LIMIT,
        ),
    )(h, w_eff, wl_eff)


# ---------------------------------------------------------------------------
# Kernel 2: K-tiled aggregation + fused epilogue
#   out[i-tile] = relu?( sum_k A[i,k-tile] @ xw[k-tile] + xl[i-tile] + bias )
# ---------------------------------------------------------------------------
def gcn_aggregate(a_p, xw, xl, bias, *, relu, out_dtype, tm, tk):
    Np = a_p.shape[0]
    Fp = xw.shape[1]

    def kernel(a_ref, xw_ref, xl_ref, b_ref, o_ref, acc_ref):
        k = pl.program_id(1)

        @pl.when(k == 0)
        def _init():
            # Fold the linear branch + (bias|bn_shift) into the accumulator init.
            acc_ref[...] = xl_ref[...].astype(jnp.float32) + b_ref[...]

        acc_ref[...] += jnp.dot(a_ref[...], xw_ref[...],
                                preferred_element_type=jnp.float32)

        @pl.when(k == pl.num_programs(1) - 1)
        def _finalize():
            y = acc_ref[...]
            if relu:
                y = jnp.maximum(y, 0.0)     # f32 epilogue (v5e has no bf16 VPU)
            o_ref[...] = y.astype(o_ref.dtype)

    return pl.pallas_call(
        kernel,
        out_shape=jax.ShapeDtypeStruct((Np, Fp), out_dtype),
        grid=(Np // tm, Np // tk),
        in_specs=[
            pl.BlockSpec((tm, tk), lambda i, k: (i, k)),    # A_hat (row, K) tile
            pl.BlockSpec((tk, Fp), lambda i, k: (k, 0)),    # xw K tile
            pl.BlockSpec((tm, Fp), lambda i, k: (i, 0)),    # xl row tile
            pl.BlockSpec((1, Fp), lambda i, k: (0, 0)),     # bias / bn_shift
        ],
        out_specs=pl.BlockSpec((tm, Fp), lambda i, k: (i, 0)),
        scratch_shapes=[pltpu.VMEM((tm, Fp), jnp.float32)],
        compiler_params=pltpu.CompilerParams(
            # Row axis parallel (v7x: 2 TCs split row tiles), reduction axis last.
            dimension_semantics=("parallel", "arbitrary"),
            vmem_limit_bytes=VMEM_LIMIT,
        ),
    )(a_p, xw, xl, bias)


# ---------------------------------------------------------------------------
# Full forward: pad/cast/fold once in the wrapper, two pallas_calls per layer
# ---------------------------------------------------------------------------
def gcn_forward(a_hat, feat, params, use_linear=True):
    assert use_linear, "kernel built for use_linear=True"
    n_layers = len(params["W"])
    N = a_hat.shape[0]
    n_classes = params["W"][-1].shape[1]

    # Pad node count so both the row tile and the K tile divide it exactly.
    Np = _round_up(N, TM)
    tk = min(TK_MAX, Np)
    Np = _round_up(Np, tk)

    a_p = _pad2d(a_hat, Np, Np).astype(jnp.bfloat16)
    h = _pad2d(feat, Np, _round_up(feat.shape[1], LANES)).astype(jnp.bfloat16)

    for i in range(n_layers):
        last = i == n_layers - 1
        W, Wl = params["W"][i], params["W_lin"][i]
        Finp = h.shape[1]                               # already lane-padded
        Foutp = _round_up(W.shape[1], LANES)

        if last:
            W_eff, Wl_eff = W, Wl
            shift = params["bias"][i]                   # GraphConv bias
        else:
            scale = params["bn_scale"][i]               # fold BN scale into weights
            W_eff = W * scale
            Wl_eff = Wl * scale
            shift = params["bn_shift"][i]               # BN shift becomes the bias

        Wp = _pad2d(W_eff, Finp, Foutp).astype(jnp.bfloat16)
        Wlp = _pad2d(Wl_eff, Finp, Foutp).astype(jnp.bfloat16)
        b_p = _pad2d(shift, 1, Foutp).astype(jnp.float32)

        # Projections computed once per layer (hoisted out of the K loop).
        xw, xl = gcn_project(h, Wp, Wlp)

        out_dtype = jnp.float32 if last else jnp.bfloat16
        h = gcn_aggregate(a_p, xw, xl, b_p, relu=not last,
                          out_dtype=out_dtype, tm=TM, tk=tk)

    return h[:N, :n_classes]


# Pure-JAX f32 reference (original association order) for a sanity check.
def gcn_forward_ref(a_hat, feat, params, use_linear=True):
    n_layers = len(params["W"])
    h = feat
    for i in range(n_layers):
        last = i == n_layers - 1
        y = a_hat @ h @ params["W"][i]
        if use_linear:
            y = y + h @ params["W_lin"][i]
        if last:
            y = y + params["bias"][i]
        else:
            y = jnp.maximum(y * params["bn_scale"][i] + params["bn_shift"][i], 0.0)
        h = y
    return h


if __name__ == "__main__":
    # Small synthetic sizes consistent with the module's forward.
    N = 256           # number of graph nodes
    in_feats = 32
    n_hidden = 32
    n_classes = 16
    n_layers = 3
    use_linear = True

    key = jax.random.PRNGKey(0)
    keys = jax.random.split(key, 20)

    # --- synthetic symmetric graph, normalized adjacency (norm='both', no self-loops)
    a_rand = jax.random.uniform(keys[0], (N, N))
    adj = (a_rand < 0.1).astype(jnp.float32)
    adj = jnp.maximum(adj, adj.T)                      # symmetrize
    adj = adj * (1.0 - jnp.eye(N, dtype=jnp.float32))  # no self-loops (DGL default)
    deg = jnp.maximum(adj.sum(axis=1), 1.0)            # degree clamp(min=1) as in DGL
    d_inv_sqrt = deg ** -0.5
    a_hat = d_inv_sqrt[:, None] * adj * d_inv_sqrt[None, :]

    # --- node features
    feat = jax.random.normal(keys[1], (N, in_feats), dtype=jnp.float32)

    # --- deterministic parameter init (shapes as in GCN.__init__)
    params = {"W": [], "W_lin": [], "bias": [], "bn_scale": [], "bn_shift": []}
    kidx = 2
    eps = 1e-5
    for i in range(n_layers):
        in_h = n_hidden if i > 0 else in_feats
        out_h = n_hidden if i < n_layers - 1 else n_classes

        # GraphConv weight: (in, out)
        W = jax.random.normal(keys[kidx], (in_h, out_h), dtype=jnp.float32) * (
            1.0 / jnp.sqrt(in_h))
        kidx += 1
        params["W"].append(W)

        # nn.Linear(in, out, bias=False): stored (out, in), applied as x @ W^T.
        W_lin_t = jax.random.normal(keys[kidx], (out_h, in_h), dtype=jnp.float32) * (
            1.0 / jnp.sqrt(in_h))
        kidx += 1
        params["W_lin"].append(W_lin_t.T)              # (in, out) for x @ W_lin

        # GraphConv bias only on the last layer
        if i == n_layers - 1:
            b = jax.random.normal(keys[kidx], (1, out_h), dtype=jnp.float32) * 0.1
            kidx += 1
            params["bias"].append(b)
        else:
            params["bias"].append(None)

        # BatchNorm1d (eval): fold gamma/beta/running stats into scale & shift
        if i < n_layers - 1:
            gamma = 1.0 + 0.1 * jax.random.normal(keys[kidx], (1, out_h), jnp.float32)
            beta = 0.1 * jax.random.normal(keys[kidx + 1], (1, out_h), jnp.float32)
            r_mean = 0.1 * jax.random.normal(keys[kidx + 2], (1, out_h), jnp.float32)
            r_var = jnp.abs(
                1.0 + 0.1 * jax.random.normal(keys[kidx + 3], (1, out_h), jnp.float32))
            kidx += 4
            scale = gamma / jnp.sqrt(r_var + eps)
            shift = beta - r_mean * scale
            params["bn_scale"].append(scale)
            params["bn_shift"].append(shift)
        else:
            params["bn_scale"].append(None)
            params["bn_shift"].append(None)

    # --- run Pallas kernels and verify against pure-JAX f32 reference
    out = gcn_forward(a_hat, feat, params, use_linear=use_linear)
    out = jax.block_until_ready(out)

    ref = gcn_forward_ref(a_hat, feat, params, use_linear=use_linear)
    assert out.shape == (N, n_classes), out.shape
    # bf16 MXU inputs with f32 accumulation -> loosened tolerance vs f32 reference.
    assert jnp.allclose(out, ref, atol=5e-2, rtol=5e-2), "mismatch vs reference"

    print("KERNEL_OK")
</pallas_src>

<mosaic_0001>
module attributes {stable_mosaic.version = 11 : i64} {
  func.func @kernel(%arg0: i32, %arg1: memref<256x128xbf16, #tpu.memory_space<vmem>>, %arg2: memref<128x128xbf16, #tpu.memory_space<vmem>>, %arg3: memref<128x128xbf16, #tpu.memory_space<vmem>>, %arg4: memref<256x128xbf16, #tpu.memory_space<vmem>>, %arg5: memref<256x128xbf16, #tpu.memory_space<vmem>>) attributes {dimension_semantics = [#tpu.dimension_semantics<parallel>], iteration_bounds = array<i64: 1>, scalar_prefetch = 0 : i64, scratch_operands = 0 : i64, tpu.core_type = #tpu.core_type<tc>, window_params = [{transform_indices = @transform_0, window_bounds = array<i64: 256, 128>}, {pipeline_mode = #tpu.pipeline_mode<synchronous>, transform_indices = @transform_1, window_bounds = array<i64: 128, 128>}, {pipeline_mode = #tpu.pipeline_mode<synchronous>, transform_indices = @transform_2, window_bounds = array<i64: 128, 128>}, {transform_indices = @transform_3, window_bounds = array<i64: 256, 128>}, {transform_indices = @transform_4, window_bounds = array<i64: 256, 128>}]} {
    %c0 = arith.constant 0 : index
    %c0_0 = arith.constant 0 : index
    %0 = vector.load %arg1[%c0, %c0_0] : memref<256x128xbf16, #tpu.memory_space<vmem>>, vector<256x128xbf16>
    %c0_1 = arith.constant 0 : index
    %c0_2 = arith.constant 0 : index
    %1 = vector.load %arg2[%c0_1, %c0_2] : memref<128x128xbf16, #tpu.memory_space<vmem>>, vector<128x128xbf16>
    %cst = arith.constant dense<0.000000e+00> : vector<256x128xf32>
    %2 = tpu.matmul %0, %1, %cst {dimension_numbers = #tpu.dot_dimension_numbers<[1], [0], [0], [1], [0, 0, 1, 1], [], []>} : vector<256x128xbf16>, vector<128x128xbf16>, vector<256x128xf32> -> vector<256x128xf32>
    %3 = arith.truncf %2 : vector<256x128xf32> to vector<256x128xbf16>
    %c0_3 = arith.constant 0 : index
    %c0_4 = arith.constant 0 : index
    %4 = vector.load %arg4[%c0_3, %c0_4] : memref<256x128xbf16, #tpu.memory_space<vmem>>, vector<256x128xbf16>
    tpu.vector_store %arg4[%c0_3, %c0_4], %3 {strides = array<i32>} : memref<256x128xbf16, #tpu.memory_space<vmem>>, vector<256x128xbf16>,
    %c0_5 = arith.constant 0 : index
    %c0_6 = arith.constant 0 : index
    %5 = vector.load %arg3[%c0_5, %c0_6] : memref<128x128xbf16, #tpu.memory_space<vmem>>, vector<128x128xbf16>
    %cst_7 = arith.constant dense<0.000000e+00> : vector<256x128xf32>
    %6 = tpu.matmul %0, %5, %cst_7 {dimension_numbers = #tpu.dot_dimension_numbers<[1], [0], [0], [1], [0, 0, 1, 1], [], []>} : vector<256x128xbf16>, vector<128x128xbf16>, vector<256x128xf32> -> vector<256x128xf32>
    %7 = arith.truncf %6 : vector<256x128xf32> to vector<256x128xbf16>
    %c0_8 = arith.constant 0 : index
    %c0_9 = arith.constant 0 : index
    %8 = vector.load %arg5[%c0_8, %c0_9] : memref<256x128xbf16, #tpu.memory_space<vmem>>, vector<256x128xbf16>
    tpu.vector_store %arg5[%c0_8, %c0_9], %7 {strides = array<i32>} : memref<256x128xbf16, #tpu.memory_space<vmem>>, vector<256x128xbf16>,
    return
  }
  func.func @transform_0(%arg0: i32) -> (i32, i32) {
    %c0_i32 = arith.constant 0 : i32
    %c0_i32_0 = arith.constant 0 : i32
    return %arg0, %c0_i32 : i32, i32
  }
  func.func @transform_1(%arg0: i32) -> (i32, i32) {
    %c0_i32 = arith.constant 0 : i32
    %c0_i32_0 = arith.constant 0 : i32
    %c0_i32_1 = arith.constant 0 : i32
    return %c0_i32, %c0_i32_0 : i32, i32
  }
  func.func @transform_2(%arg0: i32) -> (i32, i32) {
    %c0_i32 = arith.constant 0 : i32
    %c0_i32_0 = arith.constant 0 : i32
    %c0_i32_1 = arith.constant 0 : i32
    return %c0_i32, %c0_i32_0 : i32, i32
  }
  func.func @transform_3(%arg0: i32) -> (i32, i32) {
    %c0_i32 = arith.constant 0 : i32
    %c0_i32_0 = arith.constant 0 : i32
    return %arg0, %c0_i32 : i32, i32
  }
  func.func @transform_4(%arg0: i32) -> (i32, i32) {
    %c0_i32 = arith.constant 0 : i32
    %c0_i32_0 = arith.constant 0 : i32
    return %arg0, %c0_i32 : i32, i32
  }
}

</mosaic_0001>

<llo_original>
// kernel: tpu_custom_call.1
$region0: #{tpu_custom_call.1}
  #allocation0 [shape = 'u32[]', space=smem, size = 0x4, offset = 0x4, fixed_abs, tag = 'smem constant byte address 0x4 - core index']
  #allocation1 [shape = 'u32[144,128]{1,0:T(1,128)}', space=vmem, size = 0x12000, scoped, tag = 'internal scratch']
  %s0 = inlined_call_operand.hbm [shape: bf16[256,128], index: 0, kind: input, shape index: {}]
  %s1 = inlined_call_operand.hbm [shape: bf16[128,128], index: 1, kind: input, shape index: {}]
  %s2 = inlined_call_operand.hbm [shape: bf16[128,128], index: 2, kind: input, shape index: {}]
  %s3 = inlined_call_operand.hbm [shape: bf16[256,128], index: 3, kind: output, shape index: {0}]
  %s4 = inlined_call_operand.hbm [shape: bf16[256,128], index: 4, kind: output, shape index: {1}]
  %5 = xla_tuple %s3, %s4
  %s6 = sld [smem:[#allocation0]]
  $region42: #{tpu_custom_call.1} parent=0
    _
  %s8 = ssub.s32 1, %s6
  %s9 = scalar_select 0, %s8, %s6
  $region1: #{tpu_custom_call.1} parent=0
    #allocation2 [shape = 'u8[65536]{0}', space=vmem, size = 0x10000, scoped, tag = 'input window, operand 0, single buffered']
    #allocation3 [shape = 's32[1]{0}', space=sflag, size = 0x4, scoped, tag = 'scoped memory for tpu_custom_call.1']
    #allocation4 [shape = 's32[1]{0}', space=sflag, size = 0x4, scoped, tag = 'scoped memory for tpu_custom_call.1']
    #allocation5 [shape = 'u8[32768]{0}', space=vmem, size = 0x8000, scoped, tag = 'input window, operand 1, single buffered']
    #allocation6 [shape = 's32[1]{0}', space=sflag, size = 0x4, scoped, tag = 'scoped memory for tpu_custom_call.1']
    #allocation7 [shape = 'u8[32768]{0}', space=vmem, size = 0x8000, scoped, tag = 'input window, operand 2, single buffered']
    #allocation8 [shape = 'u8[65536]{0}', space=vmem, size = 0x10000, scoped, tag = 'output window, operand 0, single buffered']
    #allocation9 [shape = 'u8[65536]{0}', space=vmem, size = 0x10000, scoped, tag = 'output window, operand 1, single buffered']
    #allocation10 [shape = 's32[1]{0}', space=sflag, size = 0x4, scoped, tag = 'scoped memory for tpu_custom_call.1']
    %10 = vsyncpa [#allocation3], 0
    %11 = vsyncpa [#allocation6], 0
    %12 = vsyncpa [#allocation4], 0
    %13 = vsyncpa [#allocation10], 0
    // Predicated region
    $region2: #{tpu_custom_call.1} parent=1 // pred_check
      _
    $region3: #{tpu_custom_call.1} parent=1 // pred_check_branch
      %15 = sbr.rel (0) target = $region5
    $region4: #{tpu_custom_call.1} parent=1 // pred_region
      %s17 = ssub.s32 2048, 2048
      %18 = vsyncadd [#allocation3], %s17
      %s19 = sshll.u32 [#allocation2], 4
      %s20 = int_to_ptr.vmem [resolvable:$true] %s19
      %25 = dma.hbm_to_vmem [thread:$0]  %s0, 2048, %s20, [#allocation3], 64, 64, 4
    $region5: #{tpu_custom_call.1} parent=1 // pred_fallthru
      _
    // Predicated region
    $region6: #{tpu_custom_call.1} parent=1 // pred_check
      _
    $region7: #{tpu_custom_call.1} parent=1 // pred_check_branch
      %27 = sbr.rel (0) target = $region9
    $region8: #{tpu_custom_call.1} parent=1 // pred_region
      %s29 = ssub.s32 1024, 1024
      %30 = vsyncadd [#allocation6], %s29
      %s31 = sshll.u32 [#allocation5], 4
      %s32 = int_to_ptr.vmem [resolvable:$true] %s31
      %37 = dma.hbm_to_vmem [thread:$0]  %s1, 1024, %s32, [#allocation6], 64, 64, 4
    $region9: #{tpu_custom_call.1} parent=1 // pred_fallthru
      _
    // Predicated region
    $region10: #{tpu_custom_call.1} parent=1 // pred_check
      _
    $region11: #{tpu_custom_call.1} parent=1 // pred_check_branch
      %39 = sbr.rel (0) target = $region13
    $region12: #{tpu_custom_call.1} parent=1 // pred_region
      %s41 = ssub.s32 1024, 1024
      %42 = vsyncadd [#allocation6], %s41
      %s43 = sshll.u32 [#allocation7], 4
      %s44 = int_to_ptr.vmem [resolvable:$true] %s43
      %49 = dma.hbm_to_vmem [thread:$0]  %s2, 1024, %s44, [#allocation6], 64, 64, 4
    $region13: #{tpu_custom_call.1} parent=1 // pred_fallthru
      _
    // Predicated region
    $region14: #{tpu_custom_call.1} parent=1 // pred_check
      _
    $region15: #{tpu_custom_call.1} parent=1 // pred_check_branch
      %51 = sbr.rel (0) target = $region17
    $region16: #{tpu_custom_call.1} parent=1 // pred_region
      %52 = dma.done [#allocation3], 2048
    $region17: #{tpu_custom_call.1} parent=1 // pred_fallthru
      _
    // Predicated region
    $region18: #{tpu_custom_call.1} parent=1 // pred_check
      _
    $region19: #{tpu_custom_call.1} parent=1 // pred_check_branch
      %54 = sbr.rel (0) target = $region21
    $region20: #{tpu_custom_call.1} parent=1 // pred_region
      %55 = dma.done [#allocation6], 1024
    $region21: #{tpu_custom_call.1} parent=1 // pred_fallthru
      _
    // Predicated region
    $region22: #{tpu_custom_call.1} parent=1 // pred_check
      _
    $region23: #{tpu_custom_call.1} parent=1 // pred_check_branch
      %57 = sbr.rel (0) target = $region25
    $region24: #{tpu_custom_call.1} parent=1 // pred_region
      %58 = dma.done [#allocation6], 1024
    $region25: #{tpu_custom_call.1} parent=1 // pred_fallthru
      _
    %v60 = vld [vmem:[#allocation2] sm:$0xf]
    %v61 = vld [vmem:[#allocation2 + $0x4] sm:$0xf]
    %v62 = vld [vmem:[#allocation2 + $0x8] sm:$0xf]
    %v63 = vld [vmem:[#allocation2 + $0xc] sm:$0xf]
    %v64 = vld [vmem:[#allocation2 + $0x10] sm:$0xf]
    %v65 = vld [vmem:[#allocation2 + $0x14] sm:$0xf]
    %v66 = vld [vmem:[#allocation2 + $0x18] sm:$0xf]
    %v67 = vld [vmem:[#allocation2 + $0x1c] sm:$0xf]
    %v68 = vld [vmem:[#allocation2 + $0x20] sm:$0xf]
    %v69 = vld [vmem:[#allocation2 + $0x24] sm:$0xf]
    %v70 = vld [vmem:[#allocation2 + $0x28] sm:$0xf]
    %v71 = vld [vmem:[#allocation2 + $0x2c] sm:$0xf]
    %v72 = vld [vmem:[#allocation2 + $0x30] sm:$0xf]
    %v73 = vld [vmem:[#allocation2 + $0x34] sm:$0xf]
    %v74 = vld [vmem:[#allocation2 + $0x38] sm:$0xf]
    %v75 = vld [vmem:[#allocation2 + $0x3c] sm:$0xf]
    %v76 = vld [vmem:[#allocation2 + $0x40] sm:$0xf]
    %v77 = vld [vmem:[#allocation2 + $0x44] sm:$0xf]
    %v78 = vld [vmem:[#allocation2 + $0x48] sm:$0xf]
    %v79 = vld [vmem:[#allocation2 + $0x4c] sm:$0xf]
    %v80 = vld [vmem:[#allocation2 + $0x50] sm:$0xf]
    %v81 = vld [vmem:[#allocation2 + $0x54] sm:$0xf]
    %v82 = vld [vmem:[#allocation2 + $0x58] sm:$0xf]
    %v83 = vld [vmem:[#allocation2 + $0x5c] sm:$0xf]
    %v84 = vld [vmem:[#allocation2 + $0x60] sm:$0xf]
    %v85 = vld [vmem:[#allocation2 + $0x64] sm:$0xf]
    %v86 = vld [vmem:[#allocation2 + $0x68] sm:$0xf]
    %v87 = vld [vmem:[#allocation2 + $0x6c] sm:$0xf]
    %v88 = vld [vmem:[#allocation2 + $0x70] sm:$0xf]
    %v89 = vld [vmem:[#allocation2 + $0x74] sm:$0xf]
    %v90 = vld [vmem:[#allocation2 + $0x78] sm:$0xf]
    %v91 = vld [vmem:[#allocation2 + $0x7c] sm:$0xf]
    %v92 = vld [vmem:[#allocation5] sm:$0xf]
    %v93 = vld [vmem:[#allocation5 + $0x4] sm:$0xf]
    %v94 = vld [vmem:[#allocation5 + $0x8] sm:$0xf]
    %v95 = vld [vmem:[#allocation5 + $0xc] sm:$0xf]
    %v96 = vld [vmem:[#allocation5 + $0x10] sm:$0xf]
    %v97 = vld [vmem:[#allocation5 + $0x14] sm:$0xf]
    %v98 = vld [vmem:[#allocation5 + $0x18] sm:$0xf]
    %v99 = vld [vmem:[#allocation5 + $0x1c] sm:$0xf]
    %v100 = vld [vmem:[#allocation5 + $0x20] sm:$0xf]
    %v101 = vld [vmem:[#allocation5 + $0x24] sm:$0xf]
    %v102 = vld [vmem:[#allocation5 + $0x28] sm:$0xf]
    %v103 = vld [vmem:[#allocation5 + $0x2c] sm:$0xf]
    %v104 = vld [vmem:[#allocation5 + $0x30] sm:$0xf]
    %v105 = vld [vmem:[#allocation5 + $0x34] sm:$0xf]
    %v106 = vld [vmem:[#allocation5 + $0x38] sm:$0xf]
    %v107 = vld [vmem:[#allocation5 + $0x3c] sm:$0xf]
    %v140 = vunpack.c.l.b16 %v60
    %v141 = vunpack.c.l.b16 %v61
    %v142 = vunpack.c.l.b16 %v62
    %v143 = vunpack.c.l.b16 %v63
    %v144 = vunpack.c.l.b16 %v64
    %v145 = vunpack.c.l.b16 %v65
    %v146 = vunpack.c.l.b16 %v66
    %v147 = vunpack.c.l.b16 %v67
    %v148 = vunpack.c.l.b16 %v68
    %v149 = vunpack.c.l.b16 %v69
    %v150 = vunpack.c.l.b16 %v70
    %v151 = vunpack.c.l.b16 %v71
    %v152 = vunpack.c.l.b16 %v72
    %v153 = vunpack.c.l.b16 %v73
    %v154 = vunpack.c.l.b16 %v74
    %v155 = vunpack.c.l.b16 %v75
    %v156 = vunpack.c.l.b16 %v76
    %v157 = vunpack.c.l.b16 %v77
    %v158 = vunpack.c.l.b16 %v78
    %v159 = vunpack.c.l.b16 %v79
    %v160 = vunpack.c.l.b16 %v80
    %v161 = vunpack.c.l.b16 %v81
    %v162 = vunpack.c.l.b16 %v82
    %v163 = vunpack.c.l.b16 %v83
    %v164 = vunpack.c.l.b16 %v84
    %v165 = vunpack.c.l.b16 %v85
    %v166 = vunpack.c.l.b16 %v86
    %v167 = vunpack.c.l.b16 %v87
    %v168 = vunpack.c.l.b16 %v88
    %v169 = vunpack.c.l.b16 %v89
    %v170 = vunpack.c.l.b16 %v90
    %v171 = vunpack.c.l.b16 %v91
    %v172 = vpack.c.b16 %v141, %v140
    %v173 = vpack.c.b16 %v143, %v142
    %v174 = vpack.c.b16 %v145, %v144
    %v175 = vpack.c.b16 %v147, %v146
    %v176 = vpack.c.b16 %v149, %v148
    %v177 = vpack.c.b16 %v151, %v150
    %v178 = vpack.c.b16 %v153, %v152
    %v179 = vpack.c.b16 %v155, %v154
    %v180 = vpack.c.b16 %v157, %v156
    %v181 = vpack.c.b16 %v159, %v158
    %v182 = vpack.c.b16 %v161, %v160
    %v183 = vpack.c.b16 %v163, %v162
    %v184 = vpack.c.b16 %v165, %v164
    %v185 = vpack.c.b16 %v167, %v166
    %v186 = vpack.c.b16 %v169, %v168
    %v187 = vpack.c.b16 %v171, %v170
    %v220 = vunpack.c.l.b16 %v92
    %v221 = vunpack.c.l.b16 %v93
    %v222 = vunpack.c.l.b16 %v94
    %v223 = vunpack.c.l.b16 %v95
    %v224 = vunpack.c.l.b16 %v96
    %v225 = vunpack.c.l.b16 %v97
    %v226 = vunpack.c.l.b16 %v98
    %v227 = vunpack.c.l.b16 %v99
    %v228 = vunpack.c.l.b16 %v100
    %v229 = vunpack.c.l.b16 %v101
    %v230 = vunpack.c.l.b16 %v102
    %v231 = vunpack.c.l.b16 %v103
    %v232 = vunpack.c.l.b16 %v104
    %v233 = vunpack.c.l.b16 %v105
    %v234 = vunpack.c.l.b16 %v106
    %v235 = vunpack.c.l.b16 %v107
    %v236 = vpack.c.b16 %v221, %v220
    %v237 = vpack.c.b16 %v223, %v222
    %v238 = vpack.c.b16 %v225, %v224
    %v239 = vpack.c.b16 %v227, %v226
    %v240 = vpack.c.b16 %v229, %v228
    %v241 = vpack.c.b16 %v231, %v230
    %v242 = vpack.c.b16 %v233, %v232
    %v243 = vpack.c.b16 %v235, %v234
    %252 = vmatprep.subr.bf16.mxu0 0
    %253 = vmatpush1.bf16.msra.mxu0 %v236
    %254 = vmatprep.subr.bf16.mxu0 0
    %255 = vmatpush1.bf16.msra.mxu0 %v237
    %256 = vmatprep.subr.bf16.mxu0 0
    %257 = vmatpush1.bf16.msra.mxu0 %v238
    %258 = vmatprep.subr.bf16.mxu0 0
    %259 = vmatpush1.bf16.msra.mxu0 %v239
    %260 = vmatprep.subr.bf16.mxu0 0
    %261 = vmatpush1.bf16.msra.mxu0 %v240
    %262 = vmatprep.subr.bf16.mxu0 0
    %263 = vmatpush1.bf16.msra.mxu0 %v241
    %264 = vmatprep.subr.bf16.mxu0 0
    %265 = vmatpush1.bf16.msra.mxu0 %v242
    %266 = vmatprep.subr.bf16.mxu0 0
    %267 = vmatpush1.bf16.msra.mxu0 %v243
    %268 = vmatprep.subr.bf16.mxu0 0
    %269 = vmatpush1.bf16.msra.mxu0 0
    %270 = vmatprep.subr.bf16.mxu0 0
    %271 = vmatpush1.bf16.msra.mxu0 0
    %272 = vmatprep.subr.bf16.mxu0 0
    %273 = vmatpush1.bf16.msra.mxu0 0
    %274 = vmatprep.subr.bf16.mxu0 0
    %275 = vmatpush1.bf16.msra.mxu0 0
    %276 = vmatprep.subr.bf16.mxu0 0
    %277 = vmatpush1.bf16.msra.mxu0 0
    %278 = vmatprep.subr.bf16.mxu0 0
    %279 = vmatpush1.bf16.msra.mxu0 0
    %280 = vmatprep.subr.bf16.mxu0 0
    %281 = vmatpush1.bf16.msra.mxu0 0
    %282 = vmatprep.subr.bf16.mxu0 0
    %283 = vmatpush1.bf16.msra.mxu0 0
    %284 = vmatprep.mubr.bf16.mxu0 0
    %285 = vmatmul.mubr.bf16.gmra.mrb[0].mxu0 %v172
    %v286 = vpop.f32.mrb[0].mxu0
    %v287 = vadd.f32 0.0, %v286
    %v288 = vpop.f32.mrb[0].mxu0
    %v289 = vpop.f32.mrb[0].mxu0
    %v290 = vadd.f32 0.0, %v289
    %v291 = vpop.f32.mrb[0].mxu0
    %292 = vmatprep.mubr.bf16.mxu0 0
    %293 = vmatmul.mubr.bf16.gmra.mrb[0].mxu0 %v173
    %v294 = vpop.f32.mrb[0].mxu0
    %v295 = vadd.f32 0.0, %v294
    %v296 = vpop.f32.mrb[0].mxu0
    %v297 = vpop.f32.mrb[0].mxu0
    %v298 = vadd.f32 0.0, %v297
    %v299 = vpop.f32.mrb[0].mxu0
    %300 = vmatprep.mubr.bf16.mxu0 0
    %301 = vmatmul.mubr.bf16.gmra.mrb[0].mxu0 %v174
    %v302 = vpop.f32.mrb[0].mxu0
    %v303 = vadd.f32 0.0, %v302
    %v304 = vpop.f32.mrb[0].mxu0
    %v305 = vpop.f32.mrb[0].mxu0
    %v306 = vadd.f32 0.0, %v305
    %v307 = vpop.f32.mrb[0].mxu0
    %308 = vmatprep.mubr.bf16.mxu0 0
    %309 = vmatmul.mubr.bf16.gmra.mrb[0].mxu0 %v175
    %v310 = vpop.f32.mrb[0].mxu0
    %v311 = vadd.f32 0.0, %v310
    %v312 = vpop.f32.mrb[0].mxu0
    %v313 = vpop.f32.mrb[0].mxu0
    %v314 = vadd.f32 0.0, %v313
    %v315 = vpop.f32.mrb[0].mxu0
    %316 = vmatprep.mubr.bf16.mxu0 0
    %317 = vmatmul.mubr.bf16.gmra.mrb[0].mxu0 %v176
    %v318 = vpop.f32.mrb[0].mxu0
    %v319 = vadd.f32 0.0, %v318
    %v320 = vpop.f32.mrb[0].mxu0
    %v321 = vpop.f32.mrb[0].mxu0
    %v322 = vadd.f32 0.0, %v321
    %v323 = vpop.f32.mrb[0].mxu0
    %324 = vmatprep.mubr.bf16.mxu0 0
    %325 = vmatmul.mubr.bf16.gmra.mrb[0].mxu0 %v177
    %v326 = vpop.f32.mrb[0].mxu0
    %v327 = vadd.f32 0.0, %v326
    %v328 = vpop.f32.mrb[0].mxu0
    %v329 = vpop.f32.mrb[0].mxu0
    %v330 = vadd.f32 0.0, %v329
    %v331 = vpop.f32.mrb[0].mxu0
    %332 = vmatprep.mubr.bf16.mxu0 0
    %333 = vmatmul.mubr.bf16.gmra.mrb[0].mxu0 %v178
    %v334 = vpop.f32.mrb[0].mxu0
    %v335 = vadd.f32 0.0, %v334
    %v336 = vpop.f32.mrb[0].mxu0
    %v337 = vpop.f32.mrb[0].mxu0
    %v338 = vadd.f32 0.0, %v337
    %v339 = vpop.f32.mrb[0].mxu0
    %340 = vmatprep.mubr.bf16.mxu0 0
    %341 = vmatmul.mubr.bf16.gmra.mrb[0].mxu0 %v179
    %v342 = vpop.f32.mrb[0].mxu0
    %v343 = vadd.f32 0.0, %v342
    %v344 = vpop.f32.mrb[0].mxu0
    %v345 = vpop.f32.mrb[0].mxu0
    %v346 = vadd.f32 0.0, %v345
    %v347 = vpop.f32.mrb[0].mxu0
    %348 = vmatprep.mubr.bf16.mxu0 0
    %349 = vmatmul.mubr.bf16.gmra.mrb[0].mxu0 %v180
    %v350 = vpop.f32.mrb[0].mxu0
    %v351 = vadd.f32 0.0, %v350
    %v352 = vpop.f32.mrb[0].mxu0
    %v353 = vpop.f32.mrb[0].mxu0
    %v354 = vadd.f32 0.0, %v353
    %v355 = vpop.f32.mrb[0].mxu0
    %356 = vmatprep.mubr.bf16.mxu0 0
    %357 = vmatmul.mubr.bf16.gmra.mrb[0].mxu0 %v181
    %v358 = vpop.f32.mrb[0].mxu0
    %v359 = vadd.f32 0.0, %v358
    %v360 = vpop.f32.mrb[0].mxu0
    %v361 = vpop.f32.mrb[0].mxu0
    %v362 = vadd.f32 0.0, %v361
    %v363 = vpop.f32.mrb[0].mxu0
    %364 = vmatprep.mubr.bf16.mxu0 0
    %365 = vmatmul.mubr.bf16.gmra.mrb[0].mxu0 %v182
    %v366 = vpop.f32.mrb[0].mxu0
    %v367 = vadd.f32 0.0, %v366
    %v368 = vpop.f32.mrb[0].mxu0
    %v369 = vpop.f32.mrb[0].mxu0
    %v370 = vadd.f32 0.0, %v369
    %v371 = vpop.f32.mrb[0].mxu0
    %372 = vmatprep.mubr.bf16.mxu0 0
    %373 = vmatmul.mubr.bf16.gmra.mrb[0].mxu0 %v183
    %v374 = vpop.f32.mrb[0].mxu0
    %v375 = vadd.f32 0.0, %v374
    %v376 = vpop.f32.mrb[0].mxu0
    %v377 = vpop.f32.mrb[0].mxu0
    %v378 = vadd.f32 0.0, %v377
    %v379 = vpop.f32.mrb[0].mxu0
    %380 = vmatprep.mubr.bf16.mxu0 0
    %381 = vmatmul.mubr.bf16.gmra.mrb[0].mxu0 %v184
    %v382 = vpop.f32.mrb[0].mxu0
    %v383 = vadd.f32 0.0, %v382
    %v384 = vpop.f32.mrb[0].mxu0
    %v385 = vpop.f32.mrb[0].mxu0
    %v386 = vadd.f32 0.0, %v385
    %v387 = vpop.f32.mrb[0].mxu0
    %388 = vmatprep.mubr.bf16.mxu0 0
    %389 = vmatmul.mubr.bf16.gmra.mrb[0].mxu0 %v185
    %v390 = vpop.f32.mrb[0].mxu0
    %v391 = vadd.f32 0.0, %v390
    %v392 = vpop.f32.mrb[0].mxu0
    %v393 = vpop.f32.mrb[0].mxu0
    %v394 = vadd.f32 0.0, %v393
    %v395 = vpop.f32.mrb[0].mxu0
    %396 = vmatprep.mubr.bf16.mxu0 0
    %397 = vmatmul.mubr.bf16.gmra.mrb[0].mxu0 %v186
    %v398 = vpop.f32.mrb[0].mxu0
    %v399 = vadd.f32 0.0, %v398
    %v400 = vpop.f32.mrb[0].mxu0
    %v401 = vpop.f32.mrb[0].mxu0
    %v402 = vadd.f32 0.0, %v401
    %v403 = vpop.f32.mrb[0].mxu0
    %404 = vmatprep.mubr.bf16.mxu0 0
    %405 = vmatmul.mubr.bf16.gmra.mrb[0].mxu0 %v187
    %v406 = vpop.f32.mrb[0].mxu0
    %v407 = vadd.f32 0.0, %v406
    %v408 = vpop.f32.mrb[0].mxu0
    %v409 = vpop.f32.mrb[0].mxu0
    %v410 = vadd.f32 0.0, %v409
    %v411 = vpop.f32.mrb[0].mxu0
    %412 = vdwg.mxu0
    %v413 = vpack.c.bf16 %v290, %v287
    %v414 = vpack.c.bf16 %v298, %v295
    %v415 = vpack.c.bf16 %v306, %v303
    %v416 = vpack.c.bf16 %v314, %v311
    %v417 = vpack.c.bf16 %v322, %v319
    %v418 = vpack.c.bf16 %v330, %v327
    %v419 = vpack.c.bf16 %v338, %v335
    %v420 = vpack.c.bf16 %v346, %v343
    %v421 = vpack.c.bf16 %v354, %v351
    %v422 = vpack.c.bf16 %v362, %v359
    %v423 = vpack.c.bf16 %v370, %v367
    %v424 = vpack.c.bf16 %v378, %v375
    %v425 = vpack.c.bf16 %v386, %v383
    %v426 = vpack.c.bf16 %v394, %v391
    %v427 = vpack.c.bf16 %v402, %v399
    %v428 = vpack.c.bf16 %v410, %v407
    %v445 = vunpack.c.l.b16 %v413
    %v446 = vunpack.c.h.b16 %v413
    %v447 = vunpack.c.l.b16 %v414
    %v448 = vunpack.c.h.b16 %v414
    %v449 = vunpack.c.l.b16 %v415
    %v450 = vunpack.c.h.b16 %v415
    %v451 = vunpack.c.l.b16 %v416
    %v452 = vunpack.c.h.b16 %v416
    %v453 = vunpack.c.l.b16 %v417
    %v454 = vunpack.c.h.b16 %v417
    %v455 = vunpack.c.l.b16 %v418
    %v456 = vunpack.c.h.b16 %v418
    %v457 = vunpack.c.l.b16 %v419
    %v458 = vunpack.c.h.b16 %v419
    %v459 = vunpack.c.l.b16 %v420
    %v460 = vunpack.c.h.b16 %v420
    %v461 = vunpack.c.l.b16 %v421
    %v462 = vunpack.c.h.b16 %v421
    %v463 = vunpack.c.l.b16 %v422
    %v464 = vunpack.c.h.b16 %v422
    %v465 = vunpack.c.l.b16 %v423
    %v466 = vunpack.c.h.b16 %v423
    %v467 = vunpack.c.l.b16 %v424
    %v468 = vunpack.c.h.b16 %v424
    %v469 = vunpack.c.l.b16 %v425
    %v470 = vunpack.c.h.b16 %v425
    %v471 = vunpack.c.l.b16 %v426
    %v472 = vunpack.c.h.b16 %v426
    %v473 = vunpack.c.l.b16 %v427
    %v474 = vunpack.c.h.b16 %v427
    %v475 = vunpack.c.l.b16 %v428
    %v476 = vunpack.c.h.b16 %v428
    %v477 = vpack.c.b16 %v445, %v445
    %v478 = vpack.c.b16 %v446, %v446
    %v479 = vpack.c.b16 %v447, %v447
    %v480 = vpack.c.b16 %v448, %v448
    %v481 = vpack.c.b16 %v449, %v449
    %v482 = vpack.c.b16 %v450, %v450
    %v483 = vpack.c.b16 %v451, %v451
    %v484 = vpack.c.b16 %v452, %v452
    %v485 = vpack.c.b16 %v453, %v453
    %v486 = vpack.c.b16 %v454, %v454
    %v487 = vpack.c.b16 %v455, %v455
    %v488 = vpack.c.b16 %v456, %v456
    %v489 = vpack.c.b16 %v457, %v457
    %v490 = vpack.c.b16 %v458, %v458
    %v491 = vpack.c.b16 %v459, %v459
    %v492 = vpack.c.b16 %v460, %v460
    %v493 = vpack.c.b16 %v461, %v461
    %v494 = vpack.c.b16 %v462, %v462
    %v495 = vpack.c.b16 %v463, %v463
    %v496 = vpack.c.b16 %v464, %v464
    %v497 = vpack.c.b16 %v465, %v465
    %v498 = vpack.c.b16 %v466, %v466
    %v499 = vpack.c.b16 %v467, %v467
    %v500 = vpack.c.b16 %v468, %v468
    %v501 = vpack.c.b16 %v469, %v469
    %v502 = vpack.c.b16 %v470, %v470
    %v503 = vpack.c.b16 %v471, %v471
    %v504 = vpack.c.b16 %v472, %v472
    %v505 = vpack.c.b16 %v473, %v473
    %v506 = vpack.c.b16 %v474, %v474
    %v507 = vpack.c.b16 %v475, %v475
    %v508 = vpack.c.b16 %v476, %v476
    %541 = vst [vmem:[#allocation8] sm:$0xf] %v477
    %542 = vst [vmem:[#allocation8 + $0x4] sm:$0xf] %v478
    %543 = vst [vmem:[#allocation8 + $0x8] sm:$0xf] %v479
    %544 = vst [vmem:[#allocation8 + $0xc] sm:$0xf] %v480
    %545 = vst [vmem:[#allocation8 + $0x10] sm:$0xf] %v481
    %546 = vst [vmem:[#allocation8 + $0x14] sm:$0xf] %v482
    %547 = vst [vmem:[#allocation8 + $0x18] sm:$0xf] %v483
    %548 = vst [vmem:[#allocation8 + $0x1c] sm:$0xf] %v484
    %549 = vst [vmem:[#allocation8 + $0x20] sm:$0xf] %v485
    %550 = vst [vmem:[#allocation8 + $0x24] sm:$0xf] %v486
    %551 = vst [vmem:[#allocation8 + $0x28] sm:$0xf] %v487
    %552 = vst [vmem:[#allocation8 + $0x2c] sm:$0xf] %v488
    %553 = vst [vmem:[#allocation8 + $0x30] sm:$0xf] %v489
    %554 = vst [vmem:[#allocation8 + $0x34] sm:$0xf] %v490
    %555 = vst [vmem:[#allocation8 + $0x38] sm:$0xf] %v491
    %556 = vst [vmem:[#allocation8 + $0x3c] sm:$0xf] %v492
    %557 = vst [vmem:[#allocation8 + $0x40] sm:$0xf] %v493
    %558 = vst [vmem:[#allocation8 + $0x44] sm:$0xf] %v494
    %559 = vst [vmem:[#allocation8 + $0x48] sm:$0xf] %v495
    %560 = vst [vmem:[#allocation8 + $0x4c] sm:$0xf] %v496
    %561 = vst [vmem:[#allocation8 + $0x50] sm:$0xf] %v497
    %562 = vst [vmem:[#allocation8 + $0x54] sm:$0xf] %v498
    %563 = vst [vmem:[#allocation8 + $0x58] sm:$0xf] %v499
    %564 = vst [vmem:[#allocation8 + $0x5c] sm:$0xf] %v500
    %565 = vst [vmem:[#allocation8 + $0x60] sm:$0xf] %v501
    %566 = vst [vmem:[#allocation8 + $0x64] sm:$0xf] %v502
    %567 = vst [vmem:[#allocation8 + $0x68] sm:$0xf] %v503
    %568 = vst [vmem:[#allocation8 + $0x6c] sm:$0xf] %v504
    %569 = vst [vmem:[#allocation8 + $0x70] sm:$0xf] %v505
    %570 = vst [vmem:[#allocation8 + $0x74] sm:$0xf] %v506
    %571 = vst [vmem:[#allocation8 + $0x78] sm:$0xf] %v507
    %572 = vst [vmem:[#allocation8 + $0x7c] sm:$0xf] %v508
    %v573 = vld [vmem:[#allocation7] sm:$0xf]
    %v574 = vld [vmem:[#allocation7 + $0x4] sm:$0xf]
    %v575 = vld [vmem:[#allocation7 + $0x8] sm:$0xf]
    %v576 = vld [vmem:[#allocation7 + $0xc] sm:$0xf]
    %v577 = vld [vmem:[#allocation7 + $0x10] sm:$0xf]
    %v578 = vld [vmem:[#allocation7 + $0x14] sm:$0xf]
    %v579 = vld [vmem:[#allocation7 + $0x18] sm:$0xf]
    %v580 = vld [vmem:[#allocation7 + $0x1c] sm:$0xf]
    %v581 = vld [vmem:[#allocation7 + $0x20] sm:$0xf]
    %v582 = vld [vmem:[#allocation7 + $0x24] sm:$0xf]
    %v583 = vld [vmem:[#allocation7 + $0x28] sm:$0xf]
    %v584 = vld [vmem:[#allocation7 + $0x2c] sm:$0xf]
    %v585 = vld [vmem:[#allocation7 + $0x30] sm:$0xf]
    %v586 = vld [vmem:[#allocation7 + $0x34] sm:$0xf]
    %v587 = vld [vmem:[#allocation7 + $0x38] sm:$0xf]
    %v588 = vld [vmem:[#allocation7 + $0x3c] sm:$0xf]
    %v605 = vunpack.c.l.b16 %v573
    %v606 = vunpack.c.l.b16 %v574
    %v607 = vunpack.c.l.b16 %v575
    %v608 = vunpack.c.l.b16 %v576
    %v609 = vunpack.c.l.b16 %v577
    %v610 = vunpack.c.l.b16 %v578
    %v611 = vunpack.c.l.b16 %v579
    %v612 = vunpack.c.l.b16 %v580
    %v613 = vunpack.c.l.b16 %v581
    %v614 = vunpack.c.l.b16 %v582
    %v615 = vunpack.c.l.b16 %v583
    %v616 = vunpack.c.l.b16 %v584
    %v617 = vunpack.c.l.b16 %v585
    %v618 = vunpack.c.l.b16 %v586
    %v619 = vunpack.c.l.b16 %v587
    %v620 = vunpack.c.l.b16 %v588
    %v621 = vpack.c.b16 %v606, %v605
    %v622 = vpack.c.b16 %v608, %v607
    %v623 = vpack.c.b16 %v610, %v609
    %v624 = vpack.c.b16 %v612, %v611
    %v625 = vpack.c.b16 %v614, %v613
    %v626 = vpack.c.b16 %v616, %v615
    %v627 = vpack.c.b16 %v618, %v617
    %v628 = vpack.c.b16 %v620, %v619
    %637 = vmatprep.subr.bf16.mxu0 0
    %638 = vmatpush1.bf16.msra.mxu0 %v621
    %639 = vmatprep.subr.bf16.mxu0 0
    %640 = vmatpush1.bf16.msra.mxu0 %v622
    %641 = vmatprep.subr.bf16.mxu0 0
    %642 = vmatpush1.bf16.msra.mxu0 %v623
    %643 = vmatprep.subr.bf16.mxu0 0
    %644 = vmatpush1.bf16.msra.mxu0 %v624
    %645 = vmatprep.subr.bf16.mxu0 0
    %646 = vmatpush1.bf16.msra.mxu0 %v625
    %647 = vmatprep.subr.bf16.mxu0 0
    %648 = vmatpush1.bf16.msra.mxu0 %v626
    %649 = vmatprep.subr.bf16.mxu0 0
    %650 = vmatpush1.bf16.msra.mxu0 %v627
    %651 = vmatprep.subr.bf16.mxu0 0
    %652 = vmatpush1.bf16.msra.mxu0 %v628
    %653 = vmatprep.subr.bf16.mxu0 0
    %654 = vmatpush1.bf16.msra.mxu0 0
    %655 = vmatprep.subr.bf16.mxu0 0
    %656 = vmatpush1.bf16.msra.mxu0 0
    %657 = vmatprep.subr.bf16.mxu0 0
    %658 = vmatpush1.bf16.msra.mxu0 0
    %659 = vmatprep.subr.bf16.mxu0 0
    %660 = vmatpush1.bf16.msra.mxu0 0
    %661 = vmatprep.subr.bf16.mxu0 0
    %662 = vmatpush1.bf16.msra.mxu0 0
    %663 = vmatprep.subr.bf16.mxu0 0
    %664 = vmatpush1.bf16.msra.mxu0 0
    %665 = vmatprep.subr.bf16.mxu0 0
    %666 = vmatpush1.bf16.msra.mxu0 0
    %667 = vmatprep.subr.bf16.mxu0 0
    %668 = vmatpush1.bf16.msra.mxu0 0
    %669 = vmatprep.mubr.bf16.mxu0 0
    %670 = vmatmul.mubr.bf16.gmra.mrb[0].mxu0 %v172
    %v671 = vpop.f32.mrb[0].mxu0
    %v672 = vadd.f32 0.0, %v671
    %v673 = vpop.f32.mrb[0].mxu0
    %v674 = vpop.f32.mrb[0].mxu0
    %v675 = vadd.f32 0.0, %v674
    %v676 = vpop.f32.mrb[0].mxu0
    %677 = vmatprep.mubr.bf16.mxu0 0
    %678 = vmatmul.mubr.bf16.gmra.mrb[0].mxu0 %v173
    %v679 = vpop.f32.mrb[0].mxu0
    %v680 = vadd.f32 0.0, %v679
    %v681 = vpop.f32.mrb[0].mxu0
    %v682 = vpop.f32.mrb[0].mxu0
    %v683 = vadd.f32 0.0, %v682
    %v684 = vpop.f32.mrb[0].mxu0
    %685 = vmatprep.mubr.bf16.mxu0 0
    %686 = vmatmul.mubr.bf16.gmra.mrb[0].mxu0 %v174
    %v687 = vpop.f32.mrb[0].mxu0
    %v688 = vadd.f32 0.0, %v687
    %v689 = vpop.f32.mrb[0].mxu0
    %v690 = vpop.f32.mrb[0].mxu0
    %v691 = vadd.f32 0.0, %v690
    %v692 = vpop.f32.mrb[0].mxu0
    %693 = vmatprep.mubr.bf16.mxu0 0
    %694 = vmatmul.mubr.bf16.gmra.mrb[0].mxu0 %v175
    %v695 = vpop.f32.mrb[0].mxu0
    %v696 = vadd.f32 0.0, %v695
    %v697 = vpop.f32.mrb[0].mxu0
    %v698 = vpop.f32.mrb[0].mxu0
    %v699 = vadd.f32 0.0, %v698
    %v700 = vpop.f32.mrb[0].mxu0
    %701 = vmatprep.mubr.bf16.mxu0 0
    %702 = vmatmul.mubr.bf16.gmra.mrb[0].mxu0 %v176
    %v703 = vpop.f32.mrb[0].mxu0
    %v704 = vadd.f32 0.0, %v703
    %v705 = vpop.f32.mrb[0].mxu0
    %v706 = vpop.f32.mrb[0].mxu0
    %v707 = vadd.f32 0.0, %v706
    %v708 = vpop.f32.mrb[0].mxu0
    %709 = vmatprep.mubr.bf16.mxu0 0
    %710 = vmatmul.mubr.bf16.gmra.mrb[0].mxu0 %v177
    %v711 = vpop.f32.mrb[0].mxu0
    %v712 = vadd.f32 0.0, %v711
    %v713 = vpop.f32.mrb[0].mxu0
    %v714 = vpop.f32.mrb[0].mxu0
    %v715 = vadd.f32 0.0, %v714
    %v716 = vpop.f32.mrb[0].mxu0
    %717 = vmatprep.mubr.bf16.mxu0 0
    %718 = vmatmul.mubr.bf16.gmra.mrb[0].mxu0 %v178
    %v719 = vpop.f32.mrb[0].mxu0
    %v720 = vadd.f32 0.0, %v719
    %v721 = vpop.f32.mrb[0].mxu0
    %v722 = vpop.f32.mrb[0].mxu0
    %v723 = vadd.f32 0.0, %v722
    %v724 = vpop.f32.mrb[0].mxu0
    %725 = vmatprep.mubr.bf16.mxu0 0
    %726 = vmatmul.mubr.bf16.gmra.mrb[0].mxu0 %v179
    %v727 = vpop.f32.mrb[0].mxu0
    %v728 = vadd.f32 0.0, %v727
    %v729 = vpop.f32.mrb[0].mxu0
    %v730 = vpop.f32.mrb[0].mxu0
    %v731 = vadd.f32 0.0, %v730
    %v732 = vpop.f32.mrb[0].mxu0
    %733 = vmatprep.mubr.bf16.mxu0 0
    %734 = vmatmul.mubr.bf16.gmra.mrb[0].mxu0 %v180
    %v735 = vpop.f32.mrb[0].mxu0
    %v736 = vadd.f32 0.0, %v735
    %v737 = vpop.f32.mrb[0].mxu0
    %v738 = vpop.f32.mrb[0].mxu0
    %v739 = vadd.f32 0.0, %v738
    %v740 = vpop.f32.mrb[0].mxu0
    %741 = vmatprep.mubr.bf16.mxu0 0
    %742 = vmatmul.mubr.bf16.gmra.mrb[0].mxu0 %v181
    %v743 = vpop.f32.mrb[0].mxu0
    %v744 = vadd.f32 0.0, %v743
    %v745 = vpop.f32.mrb[0].mxu0
    %v746 = vpop.f32.mrb[0].mxu0
    %v747 = vadd.f32 0.0, %v746
    %v748 = vpop.f32.mrb[0].mxu0
    %749 = vmatprep.mubr.bf16.mxu0 0
    %750 = vmatmul.mubr.bf16.gmra.mrb[0].mxu0 %v182
    %v751 = vpop.f32.mrb[0].mxu0
    %v752 = vadd.f32 0.0, %v751
    %v753 = vpop.f32.mrb[0].mxu0
    %v754 = vpop.f32.mrb[0].mxu0
    %v755 = vadd.f32 0.0, %v754
    %v756 = vpop.f32.mrb[0].mxu0
    %757 = vmatprep.mubr.bf16.mxu0 0
    %758 = vmatmul.mubr.bf16.gmra.mrb[0].mxu0 %v183
    %v759 = vpop.f32.mrb[0].mxu0
    %v760 = vadd.f32 0.0, %v759
    %v761 = vpop.f32.mrb[0].mxu0
    %v762 = vpop.f32.mrb[0].mxu0
    %v763 = vadd.f32 0.0, %v762
    %v764 = vpop.f32.mrb[0].mxu0
    %765 = vmatprep.mubr.bf16.mxu0 0
    %766 = vmatmul.mubr.bf16.gmra.mrb[0].mxu0 %v184
    %v767 = vpop.f32.mrb[0].mxu0
    %v768 = vadd.f32 0.0, %v767
    %v769 = vpop.f32.mrb[0].mxu0
    %v770 = vpop.f32.mrb[0].mxu0
    %v771 = vadd.f32 0.0, %v770
    %v772 = vpop.f32.mrb[0].mxu0
    %773 = vmatprep.mubr.bf16.mxu0 0
    %774 = vmatmul.mubr.bf16.gmra.mrb[0].mxu0 %v185
    %v775 = vpop.f32.mrb[0].mxu0
    %v776 = vadd.f32 0.0, %v775
    %v777 = vpop.f32.mrb[0].mxu0
    %v778 = vpop.f32.mrb[0].mxu0
    %v779 = vadd.f32 0.0, %v778
    %v780 = vpop.f32.mrb[0].mxu0
    %781 = vmatprep.mubr.bf16.mxu0 0
    %782 = vmatmul.mubr.bf16.gmra.mrb[0].mxu0 %v186
    %v783 = vpop.f32.mrb[0].mxu0
    %v784 = vadd.f32 0.0, %v783
    %v785 = vpop.f32.mrb[0].mxu0
    %v786 = vpop.f32.mrb[0].mxu0
    %v787 = vadd.f32 0.0, %v786
    %v788 = vpop.f32.mrb[0].mxu0
    %789 = vmatprep.mubr.bf16.mxu0 0
    %790 = vmatmul.mubr.bf16.gmra.mrb[0].mxu0 %v187
    %v791 = vpop.f32.mrb[0].mxu0
    %v792 = vadd.f32 0.0, %v791
    %v793 = vpop.f32.mrb[0].mxu0
    %v794 = vpop.f32.mrb[0].mxu0
    %v795 = vadd.f32 0.0, %v794
    %v796 = vpop.f32.mrb[0].mxu0
    %797 = vdwg.mxu0
    %v798 = vpack.c.bf16 %v675, %v672
    %v799 = vpack.c.bf16 %v683, %v680
    %v800 = vpack.c.bf16 %v691, %v688
    %v801 = vpack.c.bf16 %v699, %v696
    %v802 = vpack.c.bf16 %v707, %v704
    %v803 = vpack.c.bf16 %v715, %v712
    %v804 = vpack.c.bf16 %v723, %v720
    %v805 = vpack.c.bf16 %v731, %v728
    %v806 = vpack.c.bf16 %v739, %v736
    %v807 = vpack.c.bf16 %v747, %v744
    %v808 = vpack.c.bf16 %v755, %v752
    %v809 = vpack.c.bf16 %v763, %v760
    %v810 = vpack.c.bf16 %v771, %v768
    %v811 = vpack.c.bf16 %v779, %v776
    %v812 = vpack.c.bf16 %v787, %v784
    %v813 = vpack.c.bf16 %v795, %v792
    %v830 = vunpack.c.l.b16 %v798
    %v831 = vunpack.c.h.b16 %v798
    %v832 = vunpack.c.l.b16 %v799
    %v833 = vunpack.c.h.b16 %v799
    %v834 = vunpack.c.l.b16 %v800
    %v835 = vunpack.c.h.b16 %v800
    %v836 = vunpack.c.l.b16 %v801
    %v837 = vunpack.c.h.b16 %v801
    %v838 = vunpack.c.l.b16 %v802
    %v839 = vunpack.c.h.b16 %v802
    %v840 = vunpack.c.l.b16 %v803
    %v841 = vunpack.c.h.b16 %v803
    %v842 = vunpack.c.l.b16 %v804
    %v843 = vunpack.c.h.b16 %v804
    %v844 = vunpack.c.l.b16 %v805
    %v845 = vunpack.c.h.b16 %v805
    %v846 = vunpack.c.l.b16 %v806
    %v847 = vunpack.c.h.b16 %v806
    %v848 = vunpack.c.l.b16 %v807
    %v849 = vunpack.c.h.b16 %v807
    %v850 = vunpack.c.l.b16 %v808
    %v851 = vunpack.c.h.b16 %v808
    %v852 = vunpack.c.l.b16 %v809
    %v853 = vunpack.c.h.b16 %v809
    %v854 = vunpack.c.l.b16 %v810
    %v855 = vunpack.c.h.b16 %v810
    %v856 = vunpack.c.l.b16 %v811
    %v857 = vunpack.c.h.b16 %v811
    %v858 = vunpack.c.l.b16 %v812
    %v859 = vunpack.c.h.b16 %v812
    %v860 = vunpack.c.l.b16 %v813
    %v861 = vunpack.c.h.b16 %v813
    %v862 = vpack.c.b16 %v830, %v830
    %v863 = vpack.c.b16 %v831, %v831
    %v864 = vpack.c.b16 %v832, %v832
    %v865 = vpack.c.b16 %v833, %v833
    %v866 = vpack.c.b16 %v834, %v834
    %v867 = vpack.c.b16 %v835, %v835
    %v868 = vpack.c.b16 %v836, %v836
    %v869 = vpack.c.b16 %v837, %v837
    %v870 = vpack.c.b16 %v838, %v838
    %v871 = vpack.c.b16 %v839, %v839
    %v872 = vpack.c.b16 %v840, %v840
    %v873 = vpack.c.b16 %v841, %v841
    %v874 = vpack.c.b16 %v842, %v842
    %v875 = vpack.c.b16 %v843, %v843
    %v876 = vpack.c.b16 %v844, %v844
    %v877 = vpack.c.b16 %v845, %v845
    %v878 = vpack.c.b16 %v846, %v846
    %v879 = vpack.c.b16 %v847, %v847
    %v880 = vpack.c.b16 %v848, %v848
    %v881 = vpack.c.b16 %v849, %v849
    %v882 = vpack.c.b16 %v850, %v850
    %v883 = vpack.c.b16 %v851, %v851
    %v884 = vpack.c.b16 %v852, %v852
    %v885 = vpack.c.b16 %v853, %v853
    %v886 = vpack.c.b16 %v854, %v854
    %v887 = vpack.c.b16 %v855, %v855
    %v888 = vpack.c.b16 %v856, %v856
    %v889 = vpack.c.b16 %v857, %v857
    %v890 = vpack.c.b16 %v858, %v858
    %v891 = vpack.c.b16 %v859, %v859
    %v892 = vpack.c.b16 %v860, %v860
    %v893 = vpack.c.b16 %v861, %v861
    %926 = vst [vmem:[#allocation9] sm:$0xf] %v862
    %927 = vst [vmem:[#allocation9 + $0x4] sm:$0xf] %v863
    %928 = vst [vmem:[#allocation9 + $0x8] sm:$0xf] %v864
    %929 = vst [vmem:[#allocation9 + $0xc] sm:$0xf] %v865
    %930 = vst [vmem:[#allocation9 + $0x10] sm:$0xf] %v866
    %931 = vst [vmem:[#allocation9 + $0x14] sm:$0xf] %v867
    %932 = vst [vmem:[#allocation9 + $0x18] sm:$0xf] %v868
    %933 = vst [vmem:[#allocation9 + $0x1c] sm:$0xf] %v869
    %934 = vst [vmem:[#allocation9 + $0x20] sm:$0xf] %v870
    %935 = vst [vmem:[#allocation9 + $0x24] sm:$0xf] %v871
    %936 = vst [vmem:[#allocation9 + $0x28] sm:$0xf] %v872
    %937 = vst [vmem:[#allocation9 + $0x2c] sm:$0xf] %v873
    %938 = vst [vmem:[#allocation9 + $0x30] sm:$0xf] %v874
    %939 = vst [vmem:[#allocation9 + $0x34] sm:$0xf] %v875
    %940 = vst [vmem:[#allocation9 + $0x38] sm:$0xf] %v876
    %941 = vst [vmem:[#allocation9 + $0x3c] sm:$0xf] %v877
    %942 = vst [vmem:[#allocation9 + $0x40] sm:$0xf] %v878
    %943 = vst [vmem:[#allocation9 + $0x44] sm:$0xf] %v879
    %944 = vst [vmem:[#allocation9 + $0x48] sm:$0xf] %v880
    %945 = vst [vmem:[#allocation9 + $0x4c] sm:$0xf] %v881
    %946 = vst [vmem:[#allocation9 + $0x50] sm:$0xf] %v882
    %947 = vst [vmem:[#allocation9 + $0x54] sm:$0xf] %v883
    %948 = vst [vmem:[#allocation9 + $0x58] sm:$0xf] %v884
    %949 = vst [vmem:[#allocation9 + $0x5c] sm:$0xf] %v885
    %950 = vst [vmem:[#allocation9 + $0x60] sm:$0xf] %v886
    %951 = vst [vmem:[#allocation9 + $0x64] sm:$0xf] %v887
    %952 = vst [vmem:[#allocation9 + $0x68] sm:$0xf] %v888
    %953 = vst [vmem:[#allocation9 + $0x6c] sm:$0xf] %v889
    %954 = vst [vmem:[#allocation9 + $0x70] sm:$0xf] %v890
    %955 = vst [vmem:[#allocation9 + $0x74] sm:$0xf] %v891
    %956 = vst [vmem:[#allocation9 + $0x78] sm:$0xf] %v892
    %957 = vst [vmem:[#allocation9 + $0x7c] sm:$0xf] %v893
    // Predicated region
    $region26: #{tpu_custom_call.1} parent=1 // pred_check
      _
    $region27: #{tpu_custom_call.1} parent=1 // pred_check_branch
      %959 = sbr.rel (0) target = $region29
    $region28: #{tpu_custom_call.1} parent=1 // pred_region
      %s961 = ssub.s32 2048, 2048
      %962 = vsyncadd [#allocation4], %s961
      %s963 = sshll.u32 [#allocation8], 4
      %s964 = int_to_ptr.vmem [resolvable:$true] %s963
      %969 = dma.vmem_to_hbm [thread:$0]  %s964, 2048, %s3, [#allocation4], 64, 64, 4
    $region29: #{tpu_custom_call.1} parent=1 // pred_fallthru
      _
    // Predicated region
    $region30: #{tpu_custom_call.1} parent=1 // pred_check
      _
    $region31: #{tpu_custom_call.1} parent=1 // pred_check_branch
      %971 = sbr.rel (0) target = $region33
    $region32: #{tpu_custom_call.1} parent=1 // pred_region
      %s973 = ssub.s32 2048, 2048
      %974 = vsyncadd [#allocation10], %s973
      %s975 = sshll.u32 [#allocation9], 4
      %s976 = int_to_ptr.vmem [resolvable:$true] %s975
      %981 = dma.vmem_to_hbm [thread:$0]  %s976, 2048, %s4, [#allocation10], 64, 64, 4
    $region33: #{tpu_custom_call.1} parent=1 // pred_fallthru
      _
    // Predicated region
    $region34: #{tpu_custom_call.1} parent=1 // pred_check
      _
    $region35: #{tpu_custom_call.1} parent=1 // pred_check_branch
      %983 = sbr.rel (0) target = $region37
    $region36: #{tpu_custom_call.1} parent=1 // pred_region
      %984 = dma.done [#allocation4], 2048
    $region37: #{tpu_custom_call.1} parent=1 // pred_fallthru
      _
    // Predicated region
    $region38: #{tpu_custom_call.1} parent=1 // pred_check
      _
    $region39: #{tpu_custom_call.1} parent=1 // pred_check_branch
      %986 = sbr.rel (0) target = $region41
    $region40: #{tpu_custom_call.1} parent=1 // pred_region
      %987 = dma.done [#allocation10], 2048
    $region41: #{tpu_custom_call.1} parent=1 // pred_fallthru
      _
    %988 = vsyncpa [#allocation3], 1
    %989 = vsyncpa [#allocation6], 1
    %990 = vsyncpa [#allocation4], 1
    %991 = vsyncpa [#allocation10], 1

</llo_original>
